<compile_context>
chip_gen: v5e
topology: v5e:2x2
jax: 0.10.0
libtpu: 0.0.40
codegen_flags: <defaults>
</compile_context>

<pallas_src>
import functools

import jax
import jax.numpy as jnp
from jax.experimental import pallas as pl
from jax.experimental.pallas import tpu as pltpu


# ----------------------------------------------------------------------------
# Tiled accumulator matmul (+ optional fused bias) kernel
# ----------------------------------------------------------------------------
def _round_up(x, m):
    return ((x + m - 1) // m) * m


def _matmul_kernel(*refs, add_bias):
    if add_bias:
        x_ref, w_ref, b_ref, o_ref, acc_ref = refs
    else:
        x_ref, w_ref, o_ref, acc_ref = refs
        b_ref = None

    @pl.when(pl.program_id(2) == 0)
    def _init():
        acc_ref[...] = jnp.zeros_like(acc_ref)

    acc_ref[...] += jnp.dot(x_ref[...], w_ref[...],
                            preferred_element_type=jnp.float32)

    @pl.when(pl.program_id(2) == pl.num_programs(2) - 1)
    def _finalize():
        y = acc_ref[...]
        if add_bias:
            y = y + b_ref[...]            # (1, tn) broadcast over rows
        o_ref[...] = y.astype(o_ref.dtype)


def tiled_matmul(x, w, bias=None, *, tm=256, tn=256, tk=256,
                 compute_dtype=None, out_dtype=jnp.float32):
    """o = x @ w (+ bias) as a tiled, software-pipelined MXU matmul.

    - Tiles default to 256 (MXU-shaped on v6e/v7x) and are clamped for small
      problems while staying (8, 128)-aligned.
    - Zero-padding to tile multiples is exact for matmul; output is sliced.
    - compute_dtype=jnp.bfloat16 can be passed on v5e/v6e for large problems
      (accumulation stays f32 via preferred_element_type).
    """
    M, K = x.shape
    K2, N = w.shape
    assert K == K2, (x.shape, w.shape)
    add_bias = bias is not None

    # Clamp tiles for small problems, keep lane-dense / sublane-aligned blocks.
    tm = min(tm, _round_up(M, 8))
    tk = min(tk, _round_up(K, 128))
    tn = min(tn, _round_up(N, 128))
    Mp, Kp, Np = _round_up(M, tm), _round_up(K, tk), _round_up(N, tn)

    if compute_dtype is not None:
        x = x.astype(compute_dtype)
        w = w.astype(compute_dtype)
    xp = jnp.pad(x, ((0, Mp - M), (0, Kp - K)))
    wp = jnp.pad(w, ((0, Kp - K), (0, Np - N)))

    grid = (Mp // tm, Np // tn, Kp // tk)
    in_specs = [pl.BlockSpec((tm, tk), lambda i, j, k: (i, k)),
                pl.BlockSpec((tk, tn), lambda i, j, k: (k, j))]
    operands = [xp, wp]
    if add_bias:
        bp = jnp.pad(bias.reshape(1, N).astype(jnp.float32),
                     ((0, 0), (0, Np - N)))
        in_specs.append(pl.BlockSpec((1, tn), lambda i, j, k: (0, j)))
        operands.append(bp)

    kernel = functools.partial(_matmul_kernel, add_bias=add_bias)
    flops = 2 * Mp * Np * Kp
    bytes_accessed = (xp.size * xp.dtype.itemsize
                      + wp.size * wp.dtype.itemsize
                      + Mp * Np * jnp.dtype(out_dtype).itemsize)

    out = pl.pallas_call(
        kernel,
        out_shape=jax.ShapeDtypeStruct((Mp, Np), out_dtype),
        grid_spec=pltpu.PrefetchScalarGridSpec(
            num_scalar_prefetch=0,
            grid=grid,
            in_specs=in_specs,
            out_specs=pl.BlockSpec((tm, tn), lambda i, j, k: (i, j)),
            scratch_shapes=[pltpu.VMEM((tm, tn), jnp.float32)]),
        compiler_params=pltpu.CompilerParams(
            dimension_semantics=("parallel", "parallel", "arbitrary"),
            vmem_limit_bytes=32 * 1024 * 1024),   # fits v5e/v6e/v7x scoped VMEM
        cost_estimate=pl.CostEstimate(flops=flops, transcendentals=0,
                                      bytes_accessed=bytes_accessed),
    )(*operands)
    return out[:M, :N]


# ----------------------------------------------------------------------------
# snowball_layer: parameters + forward
# ----------------------------------------------------------------------------
def init_snowball_params(key, in_features, out_features):
    """Mirrors reset_parameters(): U(-1/sqrt(out_features), 1/sqrt(out_features))."""
    kw, kb = jax.random.split(key)
    stdv_w = 1.0 / (out_features ** 0.5)
    stdv_b = 1.0 / (out_features ** 0.5)
    weight = jax.random.uniform(kw, (in_features, out_features), jnp.float32,
                                -stdv_w, stdv_w)
    bias = jax.random.uniform(kb, (out_features,), jnp.float32,
                              -stdv_b, stdv_b)
    return {"weight": weight, "bias": bias}


def snowball_forward(params, x, adj, eye=False, *, compute_dtype=None):
    weight, bias = params["weight"], params["bias"]
    if eye:
        # XW + bias, bias fused into the matmul finalize.
        return tiled_matmul(x, weight, bias, compute_dtype=compute_dtype)
    # adj @ (X @ W) + bias, bias fused into the second matmul's finalize.
    xw = tiled_matmul(x, weight, compute_dtype=compute_dtype)
    return tiled_matmul(adj, xw, bias, compute_dtype=compute_dtype)


def snowball_reference(params, x, adj, eye=False):
    """Pure-JAX reference for correctness checking."""
    xw = x @ params["weight"]
    if eye:
        return xw + params["bias"]
    return adj @ xw + params["bias"]


# ----------------------------------------------------------------------------
if __name__ == "__main__":
    key = jax.random.PRNGKey(0)
    n, in_features, out_features = 128, 64, 32

    kp, kx, ka = jax.random.split(key, 3)
    params = init_snowball_params(kp, in_features, out_features)
    x = jax.random.normal(kx, (n, in_features), jnp.float32)
    a0 = jax.random.normal(ka, (n, n), jnp.float32)
    adj = 0.5 * (a0 + a0.T) / n          # dense symmetric "adjacency"

    out = snowball_forward(params, x, adj, eye=False)
    out = jax.block_until_ready(out)
    out_eye = jax.block_until_ready(snowball_forward(params, x, adj, eye=True))

    ref = snowball_reference(params, x, adj, eye=False)
    ref_eye = snowball_reference(params, x, adj, eye=True)

    assert out.shape == (n, out_features)
    assert out_eye.shape == (n, out_features)
    assert jnp.allclose(out, ref, atol=1e-4, rtol=1e-4), "mismatch (eye=False)"
    assert jnp.allclose(out_eye, ref_eye, atol=1e-4, rtol=1e-4), "mismatch (eye=True)"

    print("KERNEL_OK")
</pallas_src>

<mosaic_0001>
module attributes {stable_mosaic.version = 11 : i64} {
  func.func @_matmul_kernel(%arg0: i32, %arg1: i32, %arg2: i32, %arg3: memref<128x128xf32, #tpu.memory_space<vmem>>, %arg4: memref<128x128xf32, #tpu.memory_space<vmem>>, %arg5: memref<128x128xf32, #tpu.memory_space<vmem>>, %arg6: memref<128x128xf32, #tpu.memory_space<vmem>>) attributes {dimension_semantics = [#tpu.dimension_semantics<parallel>, #tpu.dimension_semantics<parallel>, #tpu.dimension_semantics<arbitrary>], iteration_bounds = array<i64: 1, 1, 1>, scalar_prefetch = 0 : i64, scratch_operands = 1 : i64, tpu.core_type = #tpu.core_type<tc>, window_params = [{transform_indices = @transform_0, window_bounds = array<i64: 128, 128>}, {transform_indices = @transform_1, window_bounds = array<i64: 128, 128>}, {transform_indices = @transform_2, window_bounds = array<i64: 128, 128>}]} {
    %c0_i32 = arith.constant 0 : i32
    %0 = arith.cmpi eq, %arg2, %c0_i32 : i32
    %1 = arith.extui %0 : i1 to i32
    %c0_i32_0 = arith.constant 0 : i32
    %2 = arith.cmpi ne, %1, %c0_i32_0 : i32
    scf.if %2 {
      %cst_10 = arith.constant 0.000000e+00 : f32
      %12 = vector.broadcast %cst_10 : f32 to vector<128x128xf32>
      %c0_11 = arith.constant 0 : index
      %c0_12 = arith.constant 0 : index
      %13 = vector.load %arg6[%c0_11, %c0_12] : memref<128x128xf32, #tpu.memory_space<vmem>>, vector<128x128xf32>
      tpu.vector_store %arg6[%c0_11, %c0_12], %12 {strides = array<i32>} : memref<128x128xf32, #tpu.memory_space<vmem>>, vector<128x128xf32>,
    } else {
    }
    %c0 = arith.constant 0 : index
    %c0_1 = arith.constant 0 : index
    %3 = vector.load %arg6[%c0, %c0_1] : memref<128x128xf32, #tpu.memory_space<vmem>>, vector<128x128xf32>
    %c0_2 = arith.constant 0 : index
    %c0_3 = arith.constant 0 : index
    %4 = vector.load %arg3[%c0_2, %c0_3] : memref<128x128xf32, #tpu.memory_space<vmem>>, vector<128x128xf32>
    %c0_4 = arith.constant 0 : index
    %c0_5 = arith.constant 0 : index
    %5 = vector.load %arg4[%c0_4, %c0_5] : memref<128x128xf32, #tpu.memory_space<vmem>>, vector<128x128xf32>
    %cst = arith.constant dense<0.000000e+00> : vector<128x128xf32>
    %6 = tpu.matmul %4, %5, %cst {dimension_numbers = #tpu.dot_dimension_numbers<[1], [0], [0], [1], [0, 0, 1, 1], [], []>} : vector<128x128xf32>, vector<128x128xf32>, vector<128x128xf32> -> vector<128x128xf32>
    %7 = arith.addf %3, %6 : vector<128x128xf32>
    %c0_6 = arith.constant 0 : index
    %c0_7 = arith.constant 0 : index
    %8 = vector.load %arg6[%c0_6, %c0_7] : memref<128x128xf32, #tpu.memory_space<vmem>>, vector<128x128xf32>
    tpu.vector_store %arg6[%c0_6, %c0_7], %7 {strides = array<i32>} : memref<128x128xf32, #tpu.memory_space<vmem>>, vector<128x128xf32>,
    %c0_i32_8 = arith.constant 0 : i32
    %9 = arith.cmpi eq, %arg2, %c0_i32_8 : i32
    %10 = arith.extui %9 : i1 to i32
    %c0_i32_9 = arith.constant 0 : i32
    %11 = arith.cmpi ne, %10, %c0_i32_9 : i32
    scf.if %11 {
      %c0_10 = arith.constant 0 : index
      %c0_11 = arith.constant 0 : index
      %12 = vector.load %arg6[%c0_10, %c0_11] : memref<128x128xf32, #tpu.memory_space<vmem>>, vector<128x128xf32>
      %c0_12 = arith.constant 0 : index
      %c0_13 = arith.constant 0 : index
      %13 = vector.load %arg5[%c0_12, %c0_13] : memref<128x128xf32, #tpu.memory_space<vmem>>, vector<128x128xf32>
      tpu.vector_store %arg5[%c0_12, %c0_13], %12 {strides = array<i32>} : memref<128x128xf32, #tpu.memory_space<vmem>>, vector<128x128xf32>,
    } else {
    }
    return
  }
  func.func @transform_0(%arg0: i32, %arg1: i32, %arg2: i32) -> (i32, i32) {
    %c0_i32 = arith.constant 0 : i32
    return %arg0, %arg2 : i32, i32
  }
  func.func @transform_1(%arg0: i32, %arg1: i32, %arg2: i32) -> (i32, i32) {
    %c0_i32 = arith.constant 0 : i32
    return %arg2, %arg1 : i32, i32
  }
  func.func @transform_2(%arg0: i32, %arg1: i32, %arg2: i32) -> (i32, i32) {
    %c0_i32 = arith.constant 0 : i32
    return %arg0, %arg1 : i32, i32
  }
}

</mosaic_0001>

<llo_original>
// kernel: tpu_custom_call.1
$region0: #{tpu_custom_call.1}
  #allocation0 [shape = 'u32[]', space=smem, size = 0x4, offset = 0x4, fixed_abs, tag = 'smem constant byte address 0x4 - core index']
  #allocation1 [shape = 'u32[72,128]{1,0:T(1,128)}', space=vmem, size = 0x9000, scoped, tag = 'internal scratch']
  #allocation2 [shape = 'f32[128,128]{1,0:T(8,128)}', space=vmem, size = 0x10000, scoped, tag = 'scratch operand']
  %s0 = inlined_call_operand.hbm [shape: f32[128,128], index: 0, kind: input, shape index: {}]
  %s1 = inlined_call_operand.hbm [shape: f32[128,128], index: 1, kind: input, shape index: {}]
  %s2 = inlined_call_operand.hbm [shape: f32[128,128], index: 2, kind: output, shape index: {}]
  %s3 = sld [smem:[#allocation0]]
  $region34: #{tpu_custom_call.1} parent=0
    _
  %s5 = ssub.s32 1, %s3
  %s6 = scalar_select 0, %s5, %s3
  $region1: #{tpu_custom_call.1} parent=0
    #allocation3 [shape = 'u8[65536]{0}', space=vmem, size = 0x10000, scoped, tag = 'input window, operand 0, single buffered']
    #allocation4 [shape = 's32[1]{0}', space=sflag, size = 0x4, scoped, tag = 'scoped memory for tpu_custom_call.1']
    #allocation5 [shape = 's32[1]{0}', space=sflag, size = 0x4, scoped, tag = 'scoped memory for tpu_custom_call.1']
    #allocation6 [shape = 'u8[65536]{0}', space=vmem, size = 0x10000, scoped, tag = 'input window, operand 1, single buffered']
    #allocation7 [shape = 's32[1]{0}', space=sflag, size = 0x4, scoped, tag = 'scoped memory for tpu_custom_call.1']
    #allocation8 [shape = 'u8[65536]{0}', space=vmem, size = 0x10000, scoped, tag = 'output window, operand 0, single buffered']
    %7 = vsyncpa [#allocation4], 0
    %8 = vsyncpa [#allocation7], 0
    %9 = vsyncpa [#allocation5], 0
    // Predicated region
    $region2: #{tpu_custom_call.1} parent=1 // pred_check
      _
    $region3: #{tpu_custom_call.1} parent=1 // pred_check_branch
      %11 = sbr.rel (0) target = $region5
    $region4: #{tpu_custom_call.1} parent=1 // pred_region
      %13 = vsyncadd [#allocation4], 0
      %s14 = sshll.u32 %s0, 4
      %s15 = int_to_ptr.hbm [resolvable:$true] %s14
      %s16 = sshll.u32 [#allocation3], 4
      %s17 = int_to_ptr.vmem [resolvable:$true] %s16
      %22 = dma.hbm_to_vmem [thread:$0]  %s15, 2048, %s17, [#allocation4], 128, 128, 8
    $region5: #{tpu_custom_call.1} parent=1 // pred_fallthru
      _
    // Predicated region
    $region6: #{tpu_custom_call.1} parent=1 // pred_check
      _
    $region7: #{tpu_custom_call.1} parent=1 // pred_check_branch
      %24 = sbr.rel (0) target = $region9
    $region8: #{tpu_custom_call.1} parent=1 // pred_region
      %26 = vsyncadd [#allocation7], 0
      %s27 = sshll.u32 %s1, 4
      %s28 = int_to_ptr.hbm [resolvable:$true] %s27
      %s29 = sshll.u32 [#allocation6], 4
      %s30 = int_to_ptr.vmem [resolvable:$true] %s29
      %35 = dma.hbm_to_vmem [thread:$0]  %s28, 2048, %s30, [#allocation7], 128, 128, 8
    $region9: #{tpu_custom_call.1} parent=1 // pred_fallthru
      _
    // Predicated region
    $region10: #{tpu_custom_call.1} parent=1 // pred_check
      _
    $region11: #{tpu_custom_call.1} parent=1 // pred_check_branch
      %37 = sbr.rel (0) target = $region13
    $region12: #{tpu_custom_call.1} parent=1 // pred_region
      %39 = dma.done [#allocation4], 2048
    $region13: #{tpu_custom_call.1} parent=1 // pred_fallthru
      _
    // Predicated region
    $region14: #{tpu_custom_call.1} parent=1 // pred_check
      _
    $region15: #{tpu_custom_call.1} parent=1 // pred_check_branch
      %41 = sbr.rel (0) target = $region17
    $region16: #{tpu_custom_call.1} parent=1 // pred_region
      %43 = dma.done [#allocation7], 2048
    $region17: #{tpu_custom_call.1} parent=1 // pred_fallthru
      _
    %p44 = scmp.eq.s32.totalorder 0, 0
    // Predicated region
    $region18: #{tpu_custom_call.1} parent=1 // pred_check
      %p45 = pneg %p44
    $region19: #{tpu_custom_call.1} parent=1 // pred_check_branch
      %47 = sbr.rel (%p45) target = $region21
    $region20: #{tpu_custom_call.1} parent=1 // pred_region
      %48 = vst [vmem:[#allocation2] sm:$0xff] 0.0
      %49 = vst [vmem:[#allocation2 + $0x8] sm:$0xff] 0.0
      %50 = vst [vmem:[#allocation2 + $0x10] sm:$0xff] 0.0
      %51 = vst [vmem:[#allocation2 + $0x18] sm:$0xff] 0.0
      %52 = vst [vmem:[#allocation2 + $0x20] sm:$0xff] 0.0
      %53 = vst [vmem:[#allocation2 + $0x28] sm:$0xff] 0.0
      %54 = vst [vmem:[#allocation2 + $0x30] sm:$0xff] 0.0
      %55 = vst [vmem:[#allocation2 + $0x38] sm:$0xff] 0.0
      %56 = vst [vmem:[#allocation2 + $0x40] sm:$0xff] 0.0
      %57 = vst [vmem:[#allocation2 + $0x48] sm:$0xff] 0.0
      %58 = vst [vmem:[#allocation2 + $0x50] sm:$0xff] 0.0
      %59 = vst [vmem:[#allocation2 + $0x58] sm:$0xff] 0.0
      %60 = vst [vmem:[#allocation2 + $0x60] sm:$0xff] 0.0
      %61 = vst [vmem:[#allocation2 + $0x68] sm:$0xff] 0.0
      %62 = vst [vmem:[#allocation2 + $0x70] sm:$0xff] 0.0
      %63 = vst [vmem:[#allocation2 + $0x78] sm:$0xff] 0.0
    $region21: #{tpu_custom_call.1} parent=1 // pred_fallthru
      _
    %v64 = vld [vmem:[#allocation2] sm:$0xff]
    %v65 = vld [vmem:[#allocation2 + $0x8] sm:$0xff]
    %v66 = vld [vmem:[#allocation2 + $0x10] sm:$0xff]
    %v67 = vld [vmem:[#allocation2 + $0x18] sm:$0xff]
    %v68 = vld [vmem:[#allocation2 + $0x20] sm:$0xff]
    %v69 = vld [vmem:[#allocation2 + $0x28] sm:$0xff]
    %v70 = vld [vmem:[#allocation2 + $0x30] sm:$0xff]
    %v71 = vld [vmem:[#allocation2 + $0x38] sm:$0xff]
    %v72 = vld [vmem:[#allocation2 + $0x40] sm:$0xff]
    %v73 = vld [vmem:[#allocation2 + $0x48] sm:$0xff]
    %v74 = vld [vmem:[#allocation2 + $0x50] sm:$0xff]
    %v75 = vld [vmem:[#allocation2 + $0x58] sm:$0xff]
    %v76 = vld [vmem:[#allocation2 + $0x60] sm:$0xff]
    %v77 = vld [vmem:[#allocation2 + $0x68] sm:$0xff]
    %v78 = vld [vmem:[#allocation2 + $0x70] sm:$0xff]
    %v79 = vld [vmem:[#allocation2 + $0x78] sm:$0xff]
    %v80 = vld [vmem:[#allocation3] sm:$0xff]
    %v81 = vld [vmem:[#allocation3 + $0x8] sm:$0xff]
    %v82 = vld [vmem:[#allocation3 + $0x10] sm:$0xff]
    %v83 = vld [vmem:[#allocation3 + $0x18] sm:$0xff]
    %v84 = vld [vmem:[#allocation3 + $0x20] sm:$0xff]
    %v85 = vld [vmem:[#allocation3 + $0x28] sm:$0xff]
    %v86 = vld [vmem:[#allocation3 + $0x30] sm:$0xff]
    %v87 = vld [vmem:[#allocation3 + $0x38] sm:$0xff]
    %v88 = vld [vmem:[#allocation3 + $0x40] sm:$0xff]
    %v89 = vld [vmem:[#allocation3 + $0x48] sm:$0xff]
    %v90 = vld [vmem:[#allocation3 + $0x50] sm:$0xff]
    %v91 = vld [vmem:[#allocation3 + $0x58] sm:$0xff]
    %v92 = vld [vmem:[#allocation3 + $0x60] sm:$0xff]
    %v93 = vld [vmem:[#allocation3 + $0x68] sm:$0xff]
    %v94 = vld [vmem:[#allocation3 + $0x70] sm:$0xff]
    %v95 = vld [vmem:[#allocation3 + $0x78] sm:$0xff]
    %v96 = vld [vmem:[#allocation6] sm:$0xff]
    %v97 = vld [vmem:[#allocation6 + $0x8] sm:$0xff]
    %v98 = vld [vmem:[#allocation6 + $0x10] sm:$0xff]
    %v99 = vld [vmem:[#allocation6 + $0x18] sm:$0xff]
    %v100 = vld [vmem:[#allocation6 + $0x20] sm:$0xff]
    %v101 = vld [vmem:[#allocation6 + $0x28] sm:$0xff]
    %v102 = vld [vmem:[#allocation6 + $0x30] sm:$0xff]
    %v103 = vld [vmem:[#allocation6 + $0x38] sm:$0xff]
    %v104 = vld [vmem:[#allocation6 + $0x40] sm:$0xff]
    %v105 = vld [vmem:[#allocation6 + $0x48] sm:$0xff]
    %v106 = vld [vmem:[#allocation6 + $0x50] sm:$0xff]
    %v107 = vld [vmem:[#allocation6 + $0x58] sm:$0xff]
    %v108 = vld [vmem:[#allocation6 + $0x60] sm:$0xff]
    %v109 = vld [vmem:[#allocation6 + $0x68] sm:$0xff]
    %v110 = vld [vmem:[#allocation6 + $0x70] sm:$0xff]
    %v111 = vld [vmem:[#allocation6 + $0x78] sm:$0xff]
    %112 = vmatpush.msra.mxu0 %v111
    %113 = vmatpush.msra.mxu0 %v110
    %114 = vmatpush.msra.mxu0 %v109
    %115 = vmatpush.msra.mxu0 %v108
    %116 = vmatpush.msra.mxu0 %v107
    %117 = vmatpush.msra.mxu0 %v106
    %118 = vmatpush.msra.mxu0 %v105
    %119 = vmatpush.msra.mxu0 %v104
    %120 = vmatpush.msra.mxu0 %v103
    %121 = vmatpush.msra.mxu0 %v102
    %122 = vmatpush.msra.mxu0 %v101
    %123 = vmatpush.msra.mxu0 %v100
    %124 = vmatpush.msra.mxu0 %v99
    %125 = vmatpush.msra.mxu0 %v98
    %126 = vmatpush.msra.mxu0 %v97
    %127 = vmatpush.msra.mxu0 %v96
    %128 = vmatmul.f32.gmra.mxu0 %v80
    %v129 = vpop.f32.mrf.mxu0
    %v130 = vadd.f32 0.0, %v129
    %131 = vmatmul.f32.gmra.mxu0 %v81
    %v132 = vpop.f32.mrf.mxu0
    %v133 = vadd.f32 0.0, %v132
    %134 = vmatmul.f32.gmra.mxu0 %v82
    %v135 = vpop.f32.mrf.mxu0
    %v136 = vadd.f32 0.0, %v135
    %137 = vmatmul.f32.gmra.mxu0 %v83
    %v138 = vpop.f32.mrf.mxu0
    %v139 = vadd.f32 0.0, %v138
    %140 = vmatmul.f32.gmra.mxu0 %v84
    %v141 = vpop.f32.mrf.mxu0
    %v142 = vadd.f32 0.0, %v141
    %143 = vmatmul.f32.gmra.mxu0 %v85
    %v144 = vpop.f32.mrf.mxu0
    %v145 = vadd.f32 0.0, %v144
    %146 = vmatmul.f32.gmra.mxu0 %v86
    %v147 = vpop.f32.mrf.mxu0
    %v148 = vadd.f32 0.0, %v147
    %149 = vmatmul.f32.gmra.mxu0 %v87
    %v150 = vpop.f32.mrf.mxu0
    %v151 = vadd.f32 0.0, %v150
    %152 = vmatmul.f32.gmra.mxu0 %v88
    %v153 = vpop.f32.mrf.mxu0
    %v154 = vadd.f32 0.0, %v153
    %155 = vmatmul.f32.gmra.mxu0 %v89
    %v156 = vpop.f32.mrf.mxu0
    %v157 = vadd.f32 0.0, %v156
    %158 = vmatmul.f32.gmra.mxu0 %v90
    %v159 = vpop.f32.mrf.mxu0
    %v160 = vadd.f32 0.0, %v159
    %161 = vmatmul.f32.gmra.mxu0 %v91
    %v162 = vpop.f32.mrf.mxu0
    %v163 = vadd.f32 0.0, %v162
    %164 = vmatmul.f32.gmra.mxu0 %v92
    %v165 = vpop.f32.mrf.mxu0
    %v166 = vadd.f32 0.0, %v165
    %167 = vmatmul.f32.gmra.mxu0 %v93
    %v168 = vpop.f32.mrf.mxu0
    %v169 = vadd.f32 0.0, %v168
    %170 = vmatmul.f32.gmra.mxu0 %v94
    %v171 = vpop.f32.mrf.mxu0
    %v172 = vadd.f32 0.0, %v171
    %173 = vmatmul.f32.gmra.mxu0 %v95
    %v174 = vpop.f32.mrf.mxu0
    %v175 = vadd.f32 0.0, %v174
    %176 = vdwg.mxu0
    %v177 = vadd.f32 %v64, %v130
    %v178 = vadd.f32 %v65, %v133
    %v179 = vadd.f32 %v66, %v136
    %v180 = vadd.f32 %v67, %v139
    %v181 = vadd.f32 %v68, %v142
    %v182 = vadd.f32 %v69, %v145
    %v183 = vadd.f32 %v70, %v148
    %v184 = vadd.f32 %v71, %v151
    %v185 = vadd.f32 %v72, %v154
    %v186 = vadd.f32 %v73, %v157
    %v187 = vadd.f32 %v74, %v160
    %v188 = vadd.f32 %v75, %v163
    %v189 = vadd.f32 %v76, %v166
    %v190 = vadd.f32 %v77, %v169
    %v191 = vadd.f32 %v78, %v172
    %v192 = vadd.f32 %v79, %v175
    %193 = vst [vmem:[#allocation2] sm:$0xff] %v177
    %194 = vst [vmem:[#allocation2 + $0x8] sm:$0xff] %v178
    %195 = vst [vmem:[#allocation2 + $0x10] sm:$0xff] %v179
    %196 = vst [vmem:[#allocation2 + $0x18] sm:$0xff] %v180
    %197 = vst [vmem:[#allocation2 + $0x20] sm:$0xff] %v181
    %198 = vst [vmem:[#allocation2 + $0x28] sm:$0xff] %v182
    %199 = vst [vmem:[#allocation2 + $0x30] sm:$0xff] %v183
    %200 = vst [vmem:[#allocation2 + $0x38] sm:$0xff] %v184
    %201 = vst [vmem:[#allocation2 + $0x40] sm:$0xff] %v185
    %202 = vst [vmem:[#allocation2 + $0x48] sm:$0xff] %v186
    %203 = vst [vmem:[#allocation2 + $0x50] sm:$0xff] %v187
    %204 = vst [vmem:[#allocation2 + $0x58] sm:$0xff] %v188
    %205 = vst [vmem:[#allocation2 + $0x60] sm:$0xff] %v189
    %206 = vst [vmem:[#allocation2 + $0x68] sm:$0xff] %v190
    %207 = vst [vmem:[#allocation2 + $0x70] sm:$0xff] %v191
    %208 = vst [vmem:[#allocation2 + $0x78] sm:$0xff] %v192
    // Predicated region
    $region22: #{tpu_custom_call.1} parent=1 // pred_check
      %p209 = pneg %p44
    $region23: #{tpu_custom_call.1} parent=1 // pred_check_branch
      %211 = sbr.rel (%p209) target = $region25
    $region24: #{tpu_custom_call.1} parent=1 // pred_region
      %v212 = vld [vmem:[#allocation2] sm:$0xff]
      %v213 = vld [vmem:[#allocation2 + $0x8] sm:$0xff]
      %v214 = vld [vmem:[#allocation2 + $0x10] sm:$0xff]
      %v215 = vld [vmem:[#allocation2 + $0x18] sm:$0xff]
      %v216 = vld [vmem:[#allocation2 + $0x20] sm:$0xff]
      %v217 = vld [vmem:[#allocation2 + $0x28] sm:$0xff]
      %v218 = vld [vmem:[#allocation2 + $0x30] sm:$0xff]
      %v219 = vld [vmem:[#allocation2 + $0x38] sm:$0xff]
      %v220 = vld [vmem:[#allocation2 + $0x40] sm:$0xff]
      %v221 = vld [vmem:[#allocation2 + $0x48] sm:$0xff]
      %v222 = vld [vmem:[#allocation2 + $0x50] sm:$0xff]
      %v223 = vld [vmem:[#allocation2 + $0x58] sm:$0xff]
      %v224 = vld [vmem:[#allocation2 + $0x60] sm:$0xff]
      %v225 = vld [vmem:[#allocation2 + $0x68] sm:$0xff]
      %v226 = vld [vmem:[#allocation2 + $0x70] sm:$0xff]
      %v227 = vld [vmem:[#allocation2 + $0x78] sm:$0xff]
      %228 = vst [vmem:[#allocation8] sm:$0xff] %v212
      %229 = vst [vmem:[#allocation8 + $0x8] sm:$0xff] %v213
      %230 = vst [vmem:[#allocation8 + $0x10] sm:$0xff] %v214
      %231 = vst [vmem:[#allocation8 + $0x18] sm:$0xff] %v215
      %232 = vst [vmem:[#allocation8 + $0x20] sm:$0xff] %v216
      %233 = vst [vmem:[#allocation8 + $0x28] sm:$0xff] %v217
      %234 = vst [vmem:[#allocation8 + $0x30] sm:$0xff] %v218
      %235 = vst [vmem:[#allocation8 + $0x38] sm:$0xff] %v219
      %236 = vst [vmem:[#allocation8 + $0x40] sm:$0xff] %v220
      %237 = vst [vmem:[#allocation8 + $0x48] sm:$0xff] %v221
      %238 = vst [vmem:[#allocation8 + $0x50] sm:$0xff] %v222
      %239 = vst [vmem:[#allocation8 + $0x58] sm:$0xff] %v223
      %240 = vst [vmem:[#allocation8 + $0x60] sm:$0xff] %v224
      %241 = vst [vmem:[#allocation8 + $0x68] sm:$0xff] %v225
      %242 = vst [vmem:[#allocation8 + $0x70] sm:$0xff] %v226
      %243 = vst [vmem:[#allocation8 + $0x78] sm:$0xff] %v227
    $region25: #{tpu_custom_call.1} parent=1 // pred_fallthru
      _
    // Predicated region
    $region26: #{tpu_custom_call.1} parent=1 // pred_check
      _
    $region27: #{tpu_custom_call.1} parent=1 // pred_check_branch
      %245 = sbr.rel (0) target = $region29
    $region28: #{tpu_custom_call.1} parent=1 // pred_region
      %247 = vsyncadd [#allocation5], 0
      %s248 = sshll.u32 [#allocation8], 4
      %s249 = int_to_ptr.vmem [resolvable:$true] %s248
      %s250 = sshll.u32 %s2, 4
      %s251 = int_to_ptr.hbm [resolvable:$true] %s250
      %256 = dma.vmem_to_hbm [thread:$0]  %s249, 2048, %s251, [#allocation5], 128, 128, 8
    $region29: #{tpu_custom_call.1} parent=1 // pred_fallthru
      _
    // Predicated region
    $region30: #{tpu_custom_call.1} parent=1 // pred_check
      _
    $region31: #{tpu_custom_call.1} parent=1 // pred_check_branch
      %258 = sbr.rel (0) target = $region33
    $region32: #{tpu_custom_call.1} parent=1 // pred_region
      %260 = dma.done [#allocation5], 2048
    $region33: #{tpu_custom_call.1} parent=1 // pred_fallthru
      _
    %261 = vsyncpa [#allocation4], 1
    %262 = vsyncpa [#allocation7], 1
    %263 = vsyncpa [#allocation5], 1

</llo_original>
